<compile_context>
chip_gen: v5e
topology: v5e:2x2
jax: 0.10.0
libtpu: 0.0.40
codegen_flags: <defaults>
</compile_context>

<pallas_src>
import functools

import jax
import jax.numpy as jnp
from jax import lax
from jax.experimental import pallas as pl
from jax.experimental.pallas import tpu as pltpu


# ---------------------------------------------------------------------------
# Fused attention kernel: one batch element per grid step
# ---------------------------------------------------------------------------
def _fused_attention_kernel(x_ref, wqkv_ref, wproj_ref, bias_ref, o_ref, *,
                            num_heads, scale):
    """x_ref:(1,N,C) bf16, wqkv_ref:(C,3C) bf16, wproj_ref:(C,C) bf16,
    bias_ref:(1,C) f32, o_ref:(1,N,C) f32."""
    x = x_ref[0]                                    # (N, C) bf16
    N, C = x.shape
    d = C // num_heads

    # qkv projection: single lane-dense GEMM, bf16 in / f32 accumulate on MXU.
    qkv = jnp.dot(x, wqkv_ref[...], preferred_element_type=jnp.float32)   # (N, 3C)

    head_outs = []
    for h in range(num_heads):                      # static unroll; stays in VMEM
        qh = qkv[:, h * d:(h + 1) * d].astype(jnp.bfloat16)
        kh = qkv[:, C + h * d:C + (h + 1) * d].astype(jnp.bfloat16)
        vh = qkv[:, 2 * C + h * d:2 * C + (h + 1) * d].astype(jnp.bfloat16)

        # QK^T without an explicit transpose: contract the last axes.
        s = lax.dot_general(qh, kh, (((1,), (1,)), ((), ())),
                            preferred_element_type=jnp.float32) * scale   # (N, N)
        m = jnp.max(s, axis=-1, keepdims=True)
        p = jnp.exp(s - m)
        # divide -> EUP approx reciprocal (otherwise-idle slot)
        p = p * pl.reciprocal(jnp.sum(p, axis=-1, keepdims=True), approx=True)

        head_outs.append(jnp.dot(p.astype(jnp.bfloat16), vh,
                                 preferred_element_type=jnp.float32))     # (N, d)

    o = jnp.concatenate(head_outs, axis=-1).astype(jnp.bfloat16)          # (N, C)
    y = jnp.dot(o, wproj_ref[...], preferred_element_type=jnp.float32)    # (N, C)
    o_ref[0] = y + bias_ref[...]


def attention_forward(x, qkv_w, proj_w, proj_b, *, num_heads, qk_scale=None):
    """Forward of the PyTorch Attention module (eval mode, qkv_bias=False).

    x: (B, N, C) f32; qkv_w: (3C, C); proj_w: (C, C); proj_b: (C,)
    Returns (B, N, C) f32.
    """
    B, N, C = x.shape
    head_dim = C // num_heads
    scale = float(qk_scale) if qk_scale is not None else float(head_dim) ** -0.5

    # bf16 operands into the MXU (f32 accumulation happens in-kernel).
    x_b = x.astype(jnp.bfloat16)
    wqkv = jnp.asarray(qkv_w, jnp.float32).T.astype(jnp.bfloat16)    # (C, 3C)
    wproj = jnp.asarray(proj_w, jnp.float32).T.astype(jnp.bfloat16)  # (C, C)
    bias = jnp.asarray(proj_b, jnp.float32).reshape(1, C)

    kernel = functools.partial(_fused_attention_kernel,
                               num_heads=num_heads, scale=scale)
    return pl.pallas_call(
        kernel,
        grid=(B,),
        in_specs=[
            pl.BlockSpec((1, N, C), lambda b: (b, 0, 0)),
            pl.BlockSpec((C, 3 * C), lambda b: (0, 0)),
            pl.BlockSpec((C, C), lambda b: (0, 0)),
            pl.BlockSpec((1, C), lambda b: (0, 0)),
        ],
        out_specs=pl.BlockSpec((1, N, C), lambda b: (b, 0, 0)),
        out_shape=jax.ShapeDtypeStruct((B, N, C), jnp.float32),
        compiler_params=pltpu.CompilerParams(
            dimension_semantics=("parallel",)),   # batch steps independent (v7x 2 TCs)
    )(x_b, wqkv, wproj, bias)


# ---------------------------------------------------------------------------
# Pure-JAX reference (mirrors the PyTorch forward exactly, f32)
# ---------------------------------------------------------------------------
def attention_reference(x, qkv_w, proj_w, proj_b, num_heads, scale):
    B, N, C = x.shape
    d = C // num_heads
    qkv = jnp.einsum('bnc,fc->bnf', x, qkv_w).reshape(B, N, 3, num_heads, d)
    qkv = jnp.transpose(qkv, (2, 0, 3, 1, 4))
    q, k, v = qkv[0], qkv[1], qkv[2]
    attn = jnp.einsum('bhqd,bhkd->bhqk', q, k) * scale
    attn = jax.nn.softmax(attn, axis=-1)
    o = jnp.einsum('bhqk,bhkd->bhqd', attn, v)
    o = jnp.transpose(o, (0, 2, 1, 3)).reshape(B, N, C)
    return jnp.einsum('bnc,fc->bnf', o, proj_w) + proj_b


# ---------------------------------------------------------------------------
if __name__ == "__main__":
    B, N, C, num_heads = 2, 16, 128, 8          # lane-dense (C % 128 == 0, N % 8 == 0)
    head_dim = C // num_heads

    key = jax.random.PRNGKey(0)
    kx, kq, kp, kb = jax.random.split(key, 4)
    x = jax.random.normal(kx, (B, N, C), jnp.float32)
    qkv_w = 0.02 * jax.random.normal(kq, (3 * C, C), jnp.float32)
    proj_w = 0.02 * jax.random.normal(kp, (C, C), jnp.float32)
    proj_b = 0.02 * jax.random.normal(kb, (C,), jnp.float32)

    fwd = jax.jit(functools.partial(attention_forward, num_heads=num_heads))
    out = fwd(x, qkv_w, proj_w, proj_b)
    jax.block_until_ready(out)
    assert out.shape == (B, N, C)

    ref = attention_reference(x, qkv_w, proj_w, proj_b, num_heads,
                              float(head_dim) ** -0.5)
    err = float(jnp.max(jnp.abs(out - ref)))
    assert err < 2e-2, f"max abs err vs reference too large: {err}"

    print("KERNEL_OK")
</pallas_src>

<mosaic_0001>
module attributes {stable_mosaic.version = 11 : i64} {
  func.func @_fused_attention_kernel(%arg0: i32, %arg1: memref<1x16x128xbf16, #tpu.memory_space<vmem>>, %arg2: memref<128x384xbf16, #tpu.memory_space<vmem>>, %arg3: memref<128x128xbf16, #tpu.memory_space<vmem>>, %arg4: memref<1x128xf32, #tpu.memory_space<vmem>>, %arg5: memref<1x16x128xf32, #tpu.memory_space<vmem>>) attributes {dimension_semantics = [#tpu.dimension_semantics<parallel>], iteration_bounds = array<i64: 2>, scalar_prefetch = 0 : i64, scratch_operands = 0 : i64, tpu.core_type = #tpu.core_type<tc>, window_params = [{transform_indices = @transform_0, window_bounds = array<i64: 1, 16, 128>}, {pipeline_mode = #tpu.pipeline_mode<synchronous>, transform_indices = @transform_1, window_bounds = array<i64: 128, 384>}, {pipeline_mode = #tpu.pipeline_mode<synchronous>, transform_indices = @transform_2, window_bounds = array<i64: 128, 128>}, {pipeline_mode = #tpu.pipeline_mode<synchronous>, transform_indices = @transform_3, window_bounds = array<i64: 1, 128>}, {transform_indices = @transform_4, window_bounds = array<i64: 1, 16, 128>}]} {
    %c0 = arith.constant 0 : index
    %c0_0 = arith.constant 0 : index
    %c0_1 = arith.constant 0 : index
    %0 = vector.load %arg1[%c0, %c0_0, %c0_1] : memref<1x16x128xbf16, #tpu.memory_space<vmem>>, vector<1x16x128xbf16>
    %1 = vector.shape_cast %0 : vector<1x16x128xbf16> to vector<16x128xbf16>
    %c0_2 = arith.constant 0 : index
    %c0_3 = arith.constant 0 : index
    %2 = vector.load %arg2[%c0_2, %c0_3] : memref<128x384xbf16, #tpu.memory_space<vmem>>, vector<128x384xbf16>
    %cst = arith.constant dense<0.000000e+00> : vector<16x384xf32>
    %3 = tpu.matmul %1, %2, %cst {dimension_numbers = #tpu.dot_dimension_numbers<[1], [0], [0], [1], [0, 0, 1, 1], [], []>} : vector<16x128xbf16>, vector<128x384xbf16>, vector<16x384xf32> -> vector<16x384xf32>
    %4 = vector.extract_strided_slice %3 {offsets = [0, 0], sizes = [16, 16], strides = [1, 1]} : vector<16x384xf32> to vector<16x16xf32>
    %5 = arith.truncf %4 : vector<16x16xf32> to vector<16x16xbf16>
    %6 = vector.extract_strided_slice %3 {offsets = [0, 128], sizes = [16, 16], strides = [1, 1]} : vector<16x384xf32> to vector<16x16xf32>
    %7 = arith.truncf %6 : vector<16x16xf32> to vector<16x16xbf16>
    %8 = vector.extract_strided_slice %3 {offsets = [0, 256], sizes = [16, 16], strides = [1, 1]} : vector<16x384xf32> to vector<16x16xf32>
    %9 = arith.truncf %8 : vector<16x16xf32> to vector<16x16xbf16>
    %cst_4 = arith.constant dense<0.000000e+00> : vector<16x16xf32>
    %10 = tpu.matmul %5, %7, %cst_4 {dimension_numbers = #tpu.dot_dimension_numbers<[1], [1], [0], [0], [0, 0, 1, 0], [], []>} : vector<16x16xbf16>, vector<16x16xbf16>, vector<16x16xf32> -> vector<16x16xf32>
    %cst_5 = arith.constant 2.500000e-01 : f32
    %11 = vector.broadcast %cst_5 : f32 to vector<16x16xf32>
    %12 = arith.mulf %10, %11 : vector<16x16xf32>
    %cst_6 = arith.constant dense<0xFF800000> : vector<16xf32>
    %13 = vector.multi_reduction <maximumf>, %12, %cst_6 [1] : vector<16x16xf32> to vector<16xf32>
    %14 = vector.shape_cast %13 : vector<16xf32> to vector<16x1xf32>
    %15 = vector.broadcast %14 : vector<16x1xf32> to vector<16x16xf32>
    %16 = arith.subf %12, %15 : vector<16x16xf32>
    %17 = math.exp %16 : vector<16x16xf32>
    %cst_7 = arith.constant dense<0.000000e+00> : vector<16xf32>
    %18 = vector.multi_reduction <add>, %17, %cst_7 [1] : vector<16x16xf32> to vector<16xf32>
    %19 = vector.shape_cast %18 : vector<16xf32> to vector<16x1xf32>
    %20 = tpu.reciprocal %19 {approx = true} : vector<16x1xf32> -> vector<16x1xf32>
    %21 = vector.broadcast %20 : vector<16x1xf32> to vector<16x16xf32>
    %22 = arith.mulf %17, %21 : vector<16x16xf32>
    %23 = arith.truncf %22 : vector<16x16xf32> to vector<16x16xbf16>
    %cst_8 = arith.constant dense<0.000000e+00> : vector<16x16xf32>
    %24 = tpu.matmul %23, %9, %cst_8 {dimension_numbers = #tpu.dot_dimension_numbers<[1], [0], [0], [1], [0, 0, 1, 1], [], []>} : vector<16x16xbf16>, vector<16x16xbf16>, vector<16x16xf32> -> vector<16x16xf32>
    %25 = vector.extract_strided_slice %3 {offsets = [0, 16], sizes = [16, 16], strides = [1, 1]} : vector<16x384xf32> to vector<16x16xf32>
    %26 = arith.truncf %25 : vector<16x16xf32> to vector<16x16xbf16>
    %27 = vector.extract_strided_slice %3 {offsets = [0, 144], sizes = [16, 16], strides = [1, 1]} : vector<16x384xf32> to vector<16x16xf32>
    %28 = arith.truncf %27 : vector<16x16xf32> to vector<16x16xbf16>
    %29 = vector.extract_strided_slice %3 {offsets = [0, 272], sizes = [16, 16], strides = [1, 1]} : vector<16x384xf32> to vector<16x16xf32>
    %30 = arith.truncf %29 : vector<16x16xf32> to vector<16x16xbf16>
    %cst_9 = arith.constant dense<0.000000e+00> : vector<16x16xf32>
    %31 = tpu.matmul %26, %28, %cst_9 {dimension_numbers = #tpu.dot_dimension_numbers<[1], [1], [0], [0], [0, 0, 1, 0], [], []>} : vector<16x16xbf16>, vector<16x16xbf16>, vector<16x16xf32> -> vector<16x16xf32>
    %cst_10 = arith.constant 2.500000e-01 : f32
    %32 = vector.broadcast %cst_10 : f32 to vector<16x16xf32>
    %33 = arith.mulf %31, %32 : vector<16x16xf32>
    %cst_11 = arith.constant dense<0xFF800000> : vector<16xf32>
    %34 = vector.multi_reduction <maximumf>, %33, %cst_11 [1] : vector<16x16xf32> to vector<16xf32>
    %35 = vector.shape_cast %34 : vector<16xf32> to vector<16x1xf32>
    %36 = vector.broadcast %35 : vector<16x1xf32> to vector<16x16xf32>
    %37 = arith.subf %33, %36 : vector<16x16xf32>
    %38 = math.exp %37 : vector<16x16xf32>
    %cst_12 = arith.constant dense<0.000000e+00> : vector<16xf32>
    %39 = vector.multi_reduction <add>, %38, %cst_12 [1] : vector<16x16xf32> to vector<16xf32>
    %40 = vector.shape_cast %39 : vector<16xf32> to vector<16x1xf32>
    %41 = tpu.reciprocal %40 {approx = true} : vector<16x1xf32> -> vector<16x1xf32>
    %42 = vector.broadcast %41 : vector<16x1xf32> to vector<16x16xf32>
    %43 = arith.mulf %38, %42 : vector<16x16xf32>
    %44 = arith.truncf %43 : vector<16x16xf32> to vector<16x16xbf16>
    %cst_13 = arith.constant dense<0.000000e+00> : vector<16x16xf32>
    %45 = tpu.matmul %44, %30, %cst_13 {dimension_numbers = #tpu.dot_dimension_numbers<[1], [0], [0], [1], [0, 0, 1, 1], [], []>} : vector<16x16xbf16>, vector<16x16xbf16>, vector<16x16xf32> -> vector<16x16xf32>
    %46 = vector.extract_strided_slice %3 {offsets = [0, 32], sizes = [16, 16], strides = [1, 1]} : vector<16x384xf32> to vector<16x16xf32>
    %47 = arith.truncf %46 : vector<16x16xf32> to vector<16x16xbf16>
    %48 = vector.extract_strided_slice %3 {offsets = [0, 160], sizes = [16, 16], strides = [1, 1]} : vector<16x384xf32> to vector<16x16xf32>
    %49 = arith.truncf %48 : vector<16x16xf32> to vector<16x16xbf16>
    %50 = vector.extract_strided_slice %3 {offsets = [0, 288], sizes = [16, 16], strides = [1, 1]} : vector<16x384xf32> to vector<16x16xf32>
    %51 = arith.truncf %50 : vector<16x16xf32> to vector<16x16xbf16>
    %cst_14 = arith.constant dense<0.000000e+00> : vector<16x16xf32>
    %52 = tpu.matmul %47, %49, %cst_14 {dimension_numbers = #tpu.dot_dimension_numbers<[1], [1], [0], [0], [0, 0, 1, 0], [], []>} : vector<16x16xbf16>, vector<16x16xbf16>, vector<16x16xf32> -> vector<16x16xf32>
    %cst_15 = arith.constant 2.500000e-01 : f32
    %53 = vector.broadcast %cst_15 : f32 to vector<16x16xf32>
    %54 = arith.mulf %52, %53 : vector<16x16xf32>
    %cst_16 = arith.constant dense<0xFF800000> : vector<16xf32>
    %55 = vector.multi_reduction <maximumf>, %54, %cst_16 [1] : vector<16x16xf32> to vector<16xf32>
    %56 = vector.shape_cast %55 : vector<16xf32> to vector<16x1xf32>
    %57 = vector.broadcast %56 : vector<16x1xf32> to vector<16x16xf32>
    %58 = arith.subf %54, %57 : vector<16x16xf32>
    %59 = math.exp %58 : vector<16x16xf32>
    %cst_17 = arith.constant dense<0.000000e+00> : vector<16xf32>
    %60 = vector.multi_reduction <add>, %59, %cst_17 [1] : vector<16x16xf32> to vector<16xf32>
    %61 = vector.shape_cast %60 : vector<16xf32> to vector<16x1xf32>
    %62 = tpu.reciprocal %61 {approx = true} : vector<16x1xf32> -> vector<16x1xf32>
    %63 = vector.broadcast %62 : vector<16x1xf32> to vector<16x16xf32>
    %64 = arith.mulf %59, %63 : vector<16x16xf32>
    %65 = arith.truncf %64 : vector<16x16xf32> to vector<16x16xbf16>
    %cst_18 = arith.constant dense<0.000000e+00> : vector<16x16xf32>
    %66 = tpu.matmul %65, %51, %cst_18 {dimension_numbers = #tpu.dot_dimension_numbers<[1], [0], [0], [1], [0, 0, 1, 1], [], []>} : vector<16x16xbf16>, vector<16x16xbf16>, vector<16x16xf32> -> vector<16x16xf32>
    %67 = vector.extract_strided_slice %3 {offsets = [0, 48], sizes = [16, 16], strides = [1, 1]} : vector<16x384xf32> to vector<16x16xf32>
    %68 = arith.truncf %67 : vector<16x16xf32> to vector<16x16xbf16>
    %69 = vector.extract_strided_slice %3 {offsets = [0, 176], sizes = [16, 16], strides = [1, 1]} : vector<16x384xf32> to vector<16x16xf32>
    %70 = arith.truncf %69 : vector<16x16xf32> to vector<16x16xbf16>
    %71 = vector.extract_strided_slice %3 {offsets = [0, 304], sizes = [16, 16], strides = [1, 1]} : vector<16x384xf32> to vector<16x16xf32>
    %72 = arith.truncf %71 : vector<16x16xf32> to vector<16x16xbf16>
    %cst_19 = arith.constant dense<0.000000e+00> : vector<16x16xf32>
    %73 = tpu.matmul %68, %70, %cst_19 {dimension_numbers = #tpu.dot_dimension_numbers<[1], [1], [0], [0], [0, 0, 1, 0], [], []>} : vector<16x16xbf16>, vector<16x16xbf16>, vector<16x16xf32> -> vector<16x16xf32>
    %cst_20 = arith.constant 2.500000e-01 : f32
    %74 = vector.broadcast %cst_20 : f32 to vector<16x16xf32>
    %75 = arith.mulf %73, %74 : vector<16x16xf32>
    %cst_21 = arith.constant dense<0xFF800000> : vector<16xf32>
    %76 = vector.multi_reduction <maximumf>, %75, %cst_21 [1] : vector<16x16xf32> to vector<16xf32>
    %77 = vector.shape_cast %76 : vector<16xf32> to vector<16x1xf32>
    %78 = vector.broadcast %77 : vector<16x1xf32> to vector<16x16xf32>
    %79 = arith.subf %75, %78 : vector<16x16xf32>
    %80 = math.exp %79 : vector<16x16xf32>
    %cst_22 = arith.constant dense<0.000000e+00> : vector<16xf32>
    %81 = vector.multi_reduction <add>, %80, %cst_22 [1] : vector<16x16xf32> to vector<16xf32>
    %82 = vector.shape_cast %81 : vector<16xf32> to vector<16x1xf32>
    %83 = tpu.reciprocal %82 {approx = true} : vector<16x1xf32> -> vector<16x1xf32>
    %84 = vector.broadcast %83 : vector<16x1xf32> to vector<16x16xf32>
    %85 = arith.mulf %80, %84 : vector<16x16xf32>
    %86 = arith.truncf %85 : vector<16x16xf32> to vector<16x16xbf16>
    %cst_23 = arith.constant dense<0.000000e+00> : vector<16x16xf32>
    %87 = tpu.matmul %86, %72, %cst_23 {dimension_numbers = #tpu.dot_dimension_numbers<[1], [0], [0], [1], [0, 0, 1, 1], [], []>} : vector<16x16xbf16>, vector<16x16xbf16>, vector<16x16xf32> -> vector<16x16xf32>
    %88 = vector.extract_strided_slice %3 {offsets = [0, 64], sizes = [16, 16], strides = [1, 1]} : vector<16x384xf32> to vector<16x16xf32>
    %89 = arith.truncf %88 : vector<16x16xf32> to vector<16x16xbf16>
    %90 = vector.extract_strided_slice %3 {offsets = [0, 192], sizes = [16, 16], strides = [1, 1]} : vector<16x384xf32> to vector<16x16xf32>
    %91 = arith.truncf %90 : vector<16x16xf32> to vector<16x16xbf16>
    %92 = vector.extract_strided_slice %3 {offsets = [0, 320], sizes = [16, 16], strides = [1, 1]} : vector<16x384xf32> to vector<16x16xf32>
    %93 = arith.truncf %92 : vector<16x16xf32> to vector<16x16xbf16>
    %cst_24 = arith.constant dense<0.000000e+00> : vector<16x16xf32>
    %94 = tpu.matmul %89, %91, %cst_24 {dimension_numbers = #tpu.dot_dimension_numbers<[1], [1], [0], [0], [0, 0, 1, 0], [], []>} : vector<16x16xbf16>, vector<16x16xbf16>, vector<16x16xf32> -> vector<16x16xf32>
    %cst_25 = arith.constant 2.500000e-01 : f32
    %95 = vector.broadcast %cst_25 : f32 to vector<16x16xf32>
    %96 = arith.mulf %94, %95 : vector<16x16xf32>
    %cst_26 = arith.constant dense<0xFF800000> : vector<16xf32>
    %97 = vector.multi_reduction <maximumf>, %96, %cst_26 [1] : vector<16x16xf32> to vector<16xf32>
    %98 = vector.shape_cast %97 : vector<16xf32> to vector<16x1xf32>
    %99 = vector.broadcast %98 : vector<16x1xf32> to vector<16x16xf32>
    %100 = arith.subf %96, %99 : vector<16x16xf32>
    %101 = math.exp %100 : vector<16x16xf32>
    %cst_27 = arith.constant dense<0.000000e+00> : vector<16xf32>
    %102 = vector.multi_reduction <add>, %101, %cst_27 [1] : vector<16x16xf32> to vector<16xf32>
    %103 = vector.shape_cast %102 : vector<16xf32> to vector<16x1xf32>
    %104 = tpu.reciprocal %103 {approx = true} : vector<16x1xf32> -> vector<16x1xf32>
    %105 = vector.broadcast %104 : vector<16x1xf32> to vector<16x16xf32>
    %106 = arith.mulf %101, %105 : vector<16x16xf32>
    %107 = arith.truncf %106 : vector<16x16xf32> to vector<16x16xbf16>
    %cst_28 = arith.constant dense<0.000000e+00> : vector<16x16xf32>
    %108 = tpu.matmul %107, %93, %cst_28 {dimension_numbers = #tpu.dot_dimension_numbers<[1], [0], [0], [1], [0, 0, 1, 1], [], []>} : vector<16x16xbf16>, vector<16x16xbf16>, vector<16x16xf32> -> vector<16x16xf32>
    %109 = vector.extract_strided_slice %3 {offsets = [0, 80], sizes = [16, 16], strides = [1, 1]} : vector<16x384xf32> to vector<16x16xf32>
    %110 = arith.truncf %109 : vector<16x16xf32> to vector<16x16xbf16>
    %111 = vector.extract_strided_slice %3 {offsets = [0, 208], sizes = [16, 16], strides = [1, 1]} : vector<16x384xf32> to vector<16x16xf32>
    %112 = arith.truncf %111 : vector<16x16xf32> to vector<16x16xbf16>
    %113 = vector.extract_strided_slice %3 {offsets = [0, 336], sizes = [16, 16], strides = [1, 1]} : vector<16x384xf32> to vector<16x16xf32>
    %114 = arith.truncf %113 : vector<16x16xf32> to vector<16x16xbf16>
    %cst_29 = arith.constant dense<0.000000e+00> : vector<16x16xf32>
    %115 = tpu.matmul %110, %112, %cst_29 {dimension_numbers = #tpu.dot_dimension_numbers<[1], [1], [0], [0], [0, 0, 1, 0], [], []>} : vector<16x16xbf16>, vector<16x16xbf16>, vector<16x16xf32> -> vector<16x16xf32>
    %cst_30 = arith.constant 2.500000e-01 : f32
    %116 = vector.broadcast %cst_30 : f32 to vector<16x16xf32>
    %117 = arith.mulf %115, %116 : vector<16x16xf32>
    %cst_31 = arith.constant dense<0xFF800000> : vector<16xf32>
    %118 = vector.multi_reduction <maximumf>, %117, %cst_31 [1] : vector<16x16xf32> to vector<16xf32>
    %119 = vector.shape_cast %118 : vector<16xf32> to vector<16x1xf32>
    %120 = vector.broadcast %119 : vector<16x1xf32> to vector<16x16xf32>
    %121 = arith.subf %117, %120 : vector<16x16xf32>
    %122 = math.exp %121 : vector<16x16xf32>
    %cst_32 = arith.constant dense<0.000000e+00> : vector<16xf32>
    %123 = vector.multi_reduction <add>, %122, %cst_32 [1] : vector<16x16xf32> to vector<16xf32>
    %124 = vector.shape_cast %123 : vector<16xf32> to vector<16x1xf32>
    %125 = tpu.reciprocal %124 {approx = true} : vector<16x1xf32> -> vector<16x1xf32>
    %126 = vector.broadcast %125 : vector<16x1xf32> to vector<16x16xf32>
    %127 = arith.mulf %122, %126 : vector<16x16xf32>
    %128 = arith.truncf %127 : vector<16x16xf32> to vector<16x16xbf16>
    %cst_33 = arith.constant dense<0.000000e+00> : vector<16x16xf32>
    %129 = tpu.matmul %128, %114, %cst_33 {dimension_numbers = #tpu.dot_dimension_numbers<[1], [0], [0], [1], [0, 0, 1, 1], [], []>} : vector<16x16xbf16>, vector<16x16xbf16>, vector<16x16xf32> -> vector<16x16xf32>
    %130 = vector.extract_strided_slice %3 {offsets = [0, 96], sizes = [16, 16], strides = [1, 1]} : vector<16x384xf32> to vector<16x16xf32>
    %131 = arith.truncf %130 : vector<16x16xf32> to vector<16x16xbf16>
    %132 = vector.extract_strided_slice %3 {offsets = [0, 224], sizes = [16, 16], strides = [1, 1]} : vector<16x384xf32> to vector<16x16xf32>
    %133 = arith.truncf %132 : vector<16x16xf32> to vector<16x16xbf16>
    %134 = vector.extract_strided_slice %3 {offsets = [0, 352], sizes = [16, 16], strides = [1, 1]} : vector<16x384xf32> to vector<16x16xf32>
    %135 = arith.truncf %134 : vector<16x16xf32> to vector<16x16xbf16>
    %cst_34 = arith.constant dense<0.000000e+00> : vector<16x16xf32>
    %136 = tpu.matmul %131, %133, %cst_34 {dimension_numbers = #tpu.dot_dimension_numbers<[1], [1], [0], [0], [0, 0, 1, 0], [], []>} : vector<16x16xbf16>, vector<16x16xbf16>, vector<16x16xf32> -> vector<16x16xf32>
    %cst_35 = arith.constant 2.500000e-01 : f32
    %137 = vector.broadcast %cst_35 : f32 to vector<16x16xf32>
    %138 = arith.mulf %136, %137 : vector<16x16xf32>
    %cst_36 = arith.constant dense<0xFF800000> : vector<16xf32>
    %139 = vector.multi_reduction <maximumf>, %138, %cst_36 [1] : vector<16x16xf32> to vector<16xf32>
    %140 = vector.shape_cast %139 : vector<16xf32> to vector<16x1xf32>
    %141 = vector.broadcast %140 : vector<16x1xf32> to vector<16x16xf32>
    %142 = arith.subf %138, %141 : vector<16x16xf32>
    %143 = math.exp %142 : vector<16x16xf32>
    %cst_37 = arith.constant dense<0.000000e+00> : vector<16xf32>
    %144 = vector.multi_reduction <add>, %143, %cst_37 [1] : vector<16x16xf32> to vector<16xf32>
    %145 = vector.shape_cast %144 : vector<16xf32> to vector<16x1xf32>
    %146 = tpu.reciprocal %145 {approx = true} : vector<16x1xf32> -> vector<16x1xf32>
    %147 = vector.broadcast %146 : vector<16x1xf32> to vector<16x16xf32>
    %148 = arith.mulf %143, %147 : vector<16x16xf32>
    %149 = arith.truncf %148 : vector<16x16xf32> to vector<16x16xbf16>
    %cst_38 = arith.constant dense<0.000000e+00> : vector<16x16xf32>
    %150 = tpu.matmul %149, %135, %cst_38 {dimension_numbers = #tpu.dot_dimension_numbers<[1], [0], [0], [1], [0, 0, 1, 1], [], []>} : vector<16x16xbf16>, vector<16x16xbf16>, vector<16x16xf32> -> vector<16x16xf32>
    %151 = vector.extract_strided_slice %3 {offsets = [0, 112], sizes = [16, 16], strides = [1, 1]} : vector<16x384xf32> to vector<16x16xf32>
    %152 = arith.truncf %151 : vector<16x16xf32> to vector<16x16xbf16>
    %153 = vector.extract_strided_slice %3 {offsets = [0, 240], sizes = [16, 16], strides = [1, 1]} : vector<16x384xf32> to vector<16x16xf32>
    %154 = arith.truncf %153 : vector<16x16xf32> to vector<16x16xbf16>
    %155 = vector.extract_strided_slice %3 {offsets = [0, 368], sizes = [16, 16], strides = [1, 1]} : vector<16x384xf32> to vector<16x16xf32>
    %156 = arith.truncf %155 : vector<16x16xf32> to vector<16x16xbf16>
    %cst_39 = arith.constant dense<0.000000e+00> : vector<16x16xf32>
    %157 = tpu.matmul %152, %154, %cst_39 {dimension_numbers = #tpu.dot_dimension_numbers<[1], [1], [0], [0], [0, 0, 1, 0], [], []>} : vector<16x16xbf16>, vector<16x16xbf16>, vector<16x16xf32> -> vector<16x16xf32>
    %cst_40 = arith.constant 2.500000e-01 : f32
    %158 = vector.broadcast %cst_40 : f32 to vector<16x16xf32>
    %159 = arith.mulf %157, %158 : vector<16x16xf32>
    %cst_41 = arith.constant dense<0xFF800000> : vector<16xf32>
    %160 = vector.multi_reduction <maximumf>, %159, %cst_41 [1] : vector<16x16xf32> to vector<16xf32>
    %161 = vector.shape_cast %160 : vector<16xf32> to vector<16x1xf32>
    %162 = vector.broadcast %161 : vector<16x1xf32> to vector<16x16xf32>
    %163 = arith.subf %159, %162 : vector<16x16xf32>
    %164 = math.exp %163 : vector<16x16xf32>
    %cst_42 = arith.constant dense<0.000000e+00> : vector<16xf32>
    %165 = vector.multi_reduction <add>, %164, %cst_42 [1] : vector<16x16xf32> to vector<16xf32>
    %166 = vector.shape_cast %165 : vector<16xf32> to vector<16x1xf32>
    %167 = tpu.reciprocal %166 {approx = true} : vector<16x1xf32> -> vector<16x1xf32>
    %168 = vector.broadcast %167 : vector<16x1xf32> to vector<16x16xf32>
    %169 = arith.mulf %164, %168 : vector<16x16xf32>
    %170 = arith.truncf %169 : vector<16x16xf32> to vector<16x16xbf16>
    %cst_43 = arith.constant dense<0.000000e+00> : vector<16x16xf32>
    %171 = tpu.matmul %170, %156, %cst_43 {dimension_numbers = #tpu.dot_dimension_numbers<[1], [0], [0], [1], [0, 0, 1, 1], [], []>} : vector<16x16xbf16>, vector<16x16xbf16>, vector<16x16xf32> -> vector<16x16xf32>
    %172 = tpu.concatenate %24, %45, %66, %87, %108, %129, %150, %171 in 1 : vector<16x16xf32>, vector<16x16xf32>, vector<16x16xf32>, vector<16x16xf32>, vector<16x16xf32>, vector<16x16xf32>, vector<16x16xf32>, vector<16x16xf32> -> vector<16x128xf32>
    %173 = arith.truncf %172 : vector<16x128xf32> to vector<16x128xbf16>
    %c0_44 = arith.constant 0 : index
    %c0_45 = arith.constant 0 : index
    %174 = vector.load %arg3[%c0_44, %c0_45] : memref<128x128xbf16, #tpu.memory_space<vmem>>, vector<128x128xbf16>
    %cst_46 = arith.constant dense<0.000000e+00> : vector<16x128xf32>
    %175 = tpu.matmul %173, %174, %cst_46 {dimension_numbers = #tpu.dot_dimension_numbers<[1], [0], [0], [1], [0, 0, 1, 1], [], []>} : vector<16x128xbf16>, vector<128x128xbf16>, vector<16x128xf32> -> vector<16x128xf32>
    %c0_47 = arith.constant 0 : index
    %c0_48 = arith.constant 0 : index
    %176 = vector.load %arg4[%c0_47, %c0_48] : memref<1x128xf32, #tpu.memory_space<vmem>>, vector<1x128xf32>
    %177 = vector.broadcast %176 : vector<1x128xf32> to vector<16x128xf32>
    %178 = arith.addf %175, %177 : vector<16x128xf32>
    %c0_49 = arith.constant 0 : index
    %c0_50 = arith.constant 0 : index
    %c0_51 = arith.constant 0 : index
    %179 = vector.load %arg5[%c0_49, %c0_50, %c0_51] : memref<1x16x128xf32, #tpu.memory_space<vmem>>, vector<1x16x128xf32>
    %180 = vector.shape_cast %179 : vector<1x16x128xf32> to vector<16x128xf32>
    %181 = vector.shape_cast %178 : vector<16x128xf32> to vector<1x16x128xf32>
    tpu.vector_store %arg5[%c0_49, %c0_50, %c0_51], %181 {strides = array<i32>} : memref<1x16x128xf32, #tpu.memory_space<vmem>>, vector<1x16x128xf32>,
    return
  }
  func.func @transform_0(%arg0: i32) -> (i32, i32, i32) {
    %c0_i32 = arith.constant 0 : i32
    %c0_i32_0 = arith.constant 0 : i32
    %c0_i32_1 = arith.constant 0 : i32
    return %arg0, %c0_i32, %c0_i32_0 : i32, i32, i32
  }
  func.func @transform_1(%arg0: i32) -> (i32, i32) {
    %c0_i32 = arith.constant 0 : i32
    %c0_i32_0 = arith.constant 0 : i32
    %c0_i32_1 = arith.constant 0 : i32
    return %c0_i32, %c0_i32_0 : i32, i32
  }
  func.func @transform_2(%arg0: i32) -> (i32, i32) {
    %c0_i32 = arith.constant 0 : i32
    %c0_i32_0 = arith.constant 0 : i32
    %c0_i32_1 = arith.constant 0 : i32
    return %c0_i32, %c0_i32_0 : i32, i32
  }
  func.func @transform_3(%arg0: i32) -> (i32, i32) {
    %c0_i32 = arith.constant 0 : i32
    %c0_i32_0 = arith.constant 0 : i32
    %c0_i32_1 = arith.constant 0 : i32
    return %c0_i32, %c0_i32_0 : i32, i32
  }
  func.func @transform_4(%arg0: i32) -> (i32, i32, i32) {
    %c0_i32 = arith.constant 0 : i32
    %c0_i32_0 = arith.constant 0 : i32
    %c0_i32_1 = arith.constant 0 : i32
    return %arg0, %c0_i32, %c0_i32_0 : i32, i32, i32
  }
}

</mosaic_0001>

<llo_original>
// kernel: attention_forward.1
$region0: #{attention_forward.1}
  #allocation0 [shape = 'u32[]', space=smem, size = 0x4, offset = 0x4, fixed_abs, tag = 'smem constant byte address 0x4 - core index']
  #allocation1 [shape = 'u32[72,128]{1,0:T(1,128)}', space=vmem, size = 0x9000, scoped, tag = 'internal scratch']
  %s0 = inlined_call_operand.vmem [shape: bf16[2,16,128], index: 0, kind: input, shape index: {}]
  %s1 = inlined_call_operand.vmem [shape: bf16[128,384], index: 1, kind: input, shape index: {}]
  %s2 = inlined_call_operand.vmem [shape: bf16[128,128], index: 2, kind: input, shape index: {}]
  %s3 = inlined_call_operand.vmem [shape: f32[1,128], index: 3, kind: input, shape index: {}]
  %s4 = inlined_call_operand.hbm [shape: f32[2,16,128], index: 4, kind: output, shape index: {}]
  %s5 = sld [smem:[#allocation0]]
  $region49: #{attention_forward.1} parent=0
    _
  %s7 = ssub.s32 1, %s5
  %s8 = scalar_select 0, %s7, %s5
  $region1: #{attention_forward.1} parent=0
    #allocation2 [shape = 'u8[16384]{0}', space=vmem, size = 0x4000, scoped, tag = 'output window, operand 0']
    #allocation3 [shape = 's32[2]{0}', space=sflag, size = 0x8, scoped, tag = 'scoped memory for attention_forward.1']
    %9 = vsyncpa [#allocation3], 0
    %s10 = scalar_lea.sflag [#allocation3], 1
    %11 = vsyncpa %s10, 0
    loop: start=0, step=1, limit=4
    $region2: #{attention_forward.1} parent=1 // loop_pre_header
      _
    $region3: #{attention_forward.1} parent=1 // loop_header
      %s13 = sphi 0, %s17
      %p14 = scmp.ge.s32.totalorder %s13, 4
      %s23 = sphi 0, %s25
      %s26 = sphi 0, %s23
      %s27 = sphi 0, %s26
      %s43 = sphi 0, %s27
      %s47 = sphi 0, %s47
      %s49 = sphi 0, %s47
      %s50 = sphi 0, %s49
      %s64 = sphi 0, %s50
      %s68 = sphi 0, %s68
      %s70 = sphi 0, %s68
      %s71 = sphi 0, %s70
      %s85 = sphi 0, %s71
      %s89 = sphi 0, %s89
      %s91 = sphi 0, %s89
      %s92 = sphi 0, %s91
      %s106 = sphi 0, %s92
      %s112 = sphi 0, %s114
      %s115 = sphi 0, %s112
      %s116 = sphi 0, %s115
      %s132 = sphi 0, %s116
    $region4: #{attention_forward.1} parent=1 // loop_header_branch
      %16 = sbr.rel (%p14) target = $region8
    $region5: #{attention_forward.1} parent=1 // loop_body
      %s18 = ssub.s32 %s13, 1
      %s19 = ssub.s32 %s13, 2
      %s20 = sadd.s32 %s13, 1
      %s21 = ssub.s32 %s13, %s20
      %p22 = scmp.eq.s32.totalorder %s21, 0
      %s24 = sadd.s32 %s23, 1
      %s25 = scalar_select %p22, %s23, %s24
      %p28 = pneg %p22
      %p29 = scmp.eq.s32.totalorder %s13, 1
      %p30 = por %p28, %p29
      %p31 = scmp.ne.s32.totalorder %s23, %s26
      %p32 = scmp.eq.s32.totalorder %s13, 0
      %p33 = por %p31, %p32
      %p34 = scmp.ne.s32.totalorder %s23, %s26
      %p35 = scmp.eq.s32.totalorder %s18, 1
      %p36 = por %p34, %p35
      %p37 = scmp.ne.s32.totalorder %s26, %s27
      %p38 = scmp.eq.s32.totalorder %s18, 0
      %p39 = por %p37, %p38
      %p40 = scmp.ne.s32.totalorder %s26, %s27
      %p41 = scmp.eq.s32.totalorder %s19, 1
      %p42 = por %p40, %p41
      %p44 = scmp.ne.s32.totalorder %s27, %s43
      %p45 = scmp.eq.s32.totalorder %s19, 0
      %p46 = por %p44, %p45
      %s48 = sadd.s32 %s47, 1
      %p51 = scmp.eq.s32.totalorder %s13, 1
      %p52 = scmp.ne.s32.totalorder %s47, %s49
      %p53 = scmp.eq.s32.totalorder %s13, 0
      %p54 = por %p52, %p53
      %p55 = scmp.ne.s32.totalorder %s47, %s49
      %p56 = scmp.eq.s32.totalorder %s18, 1
      %p57 = por %p55, %p56
      %p58 = scmp.ne.s32.totalorder %s49, %s50
      %p59 = scmp.eq.s32.totalorder %s18, 0
      %p60 = por %p58, %p59
      %p61 = scmp.ne.s32.totalorder %s49, %s50
      %p62 = scmp.eq.s32.totalorder %s19, 1
      %p63 = por %p61, %p62
      %p65 = scmp.ne.s32.totalorder %s50, %s64
      %p66 = scmp.eq.s32.totalorder %s19, 0
      %p67 = por %p65, %p66
      %s69 = sadd.s32 %s68, 1
      %p72 = scmp.eq.s32.totalorder %s13, 1
      %p73 = scmp.ne.s32.totalorder %s68, %s70
      %p74 = scmp.eq.s32.totalorder %s13, 0
      %p75 = por %p73, %p74
      %p76 = scmp.ne.s32.totalorder %s68, %s70
      %p77 = scmp.eq.s32.totalorder %s18, 1
      %p78 = por %p76, %p77
      %p79 = scmp.ne.s32.totalorder %s70, %s71
      %p80 = scmp.eq.s32.totalorder %s18, 0
      %p81 = por %p79, %p80
      %p82 = scmp.ne.s32.totalorder %s70, %s71
      %p83 = scmp.eq.s32.totalorder %s19, 1
      %p84 = por %p82, %p83
      %p86 = scmp.ne.s32.totalorder %s71, %s85
      %p87 = scmp.eq.s32.totalorder %s19, 0
      %p88 = por %p86, %p87
      %s90 = sadd.s32 %s89, 1
      %p93 = scmp.eq.s32.totalorder %s13, 1
      %p94 = scmp.ne.s32.totalorder %s89, %s91
      %p95 = scmp.eq.s32.totalorder %s13, 0
      %p96 = por %p94, %p95
      %p97 = scmp.ne.s32.totalorder %s89, %s91
      %p98 = scmp.eq.s32.totalorder %s18, 1
      %p99 = por %p97, %p98
      %p100 = scmp.ne.s32.totalorder %s91, %s92
      %p101 = scmp.eq.s32.totalorder %s18, 0
      %p102 = por %p100, %p101
      %p103 = scmp.ne.s32.totalorder %s91, %s92
      %p104 = scmp.eq.s32.totalorder %s19, 1
      %p105 = por %p103, %p104
      %p107 = scmp.ne.s32.totalorder %s92, %s106
      %p108 = scmp.eq.s32.totalorder %s19, 0
      %p109 = por %p107, %p108
      %s110 = ssub.s32 %s13, %s20
      %p111 = scmp.eq.s32.totalorder %s110, 0
      %s113 = sadd.s32 %s112, 1
      %s114 = scalar_select %p111, %s112, %s113
      %p117 = pneg %p111
      %p118 = scmp.eq.s32.totalorder %s13, 1
      %p119 = por %p117, %p118
      %p120 = scmp.ne.s32.totalorder %s112, %s115
      %p121 = scmp.eq.s32.totalorder %s13, 0
      %p122 = por %p120, %p121
      %p123 = scmp.ne.s32.totalorder %s112, %s115
      %p124 = scmp.eq.s32.totalorder %s18, 1
      %p125 = por %p123, %p124
      %p126 = scmp.ne.s32.totalorder %s115, %s116
      %p127 = scmp.eq.s32.totalorder %s18, 0
      %p128 = por %p126, %p127
      %p129 = scmp.ne.s32.totalorder %s115, %s116
      %p130 = scmp.eq.s32.totalorder %s19, 1
      %p131 = por %p129, %p130
      %p133 = scmp.ne.s32.totalorder %s116, %s132
      %p134 = scmp.eq.s32.totalorder %s19, 0
      %p135 = por %p133, %p134
      %p136 = scmp.le.s32.totalorder 1, %s13
      %p137 = scmp.lt.s32.totalorder %s13, 3
      %p138 = pnand %p136, %p137
      %p139 = pneg %p138
      // Predicated region
      $region9: #{attention_forward.1} parent=5 // pred_check
        _
      $region10: #{attention_forward.1} parent=5 // pred_check_branch
        %141 = sbr.rel (%p138) target = $region12
      $region11: #{attention_forward.1} parent=5 // pred_region
        %s142 = ssub.s32 %s13, 1
        // Predicated region
        $region13: #{attention_forward.1} parent=11 // pred_check
          %p143 = pneg %p60
        $region14: #{attention_forward.1} parent=11 // pred_check_branch
          %145 = sbr.rel (%p143) target = $region16
        $region15: #{attention_forward.1} parent=11 // pred_region
          _
        $region16: #{attention_forward.1} parent=11 // pred_fallthru
          _
        // Predicated region
        $region17: #{attention_forward.1} parent=11 // pred_check
          %p146 = pneg %p81
        $region18: #{attention_forward.1} parent=11 // pred_check_branch
          %148 = sbr.rel (%p146) target = $region20
        $region19: #{attention_forward.1} parent=11 // pred_region
          _
        $region20: #{attention_forward.1} parent=11 // pred_fallthru
          _
        // Predicated region
        $region21: #{attention_forward.1} parent=11 // pred_check
          %p149 = pneg %p102
        $region22: #{attention_forward.1} parent=11 // pred_check_branch
          %151 = sbr.rel (%p149) target = $region24
        $region23: #{attention_forward.1} parent=11 // pred_region
          _
        $region24: #{attention_forward.1} parent=11 // pred_fallthru
          _
      $region12: #{attention_forward.1} parent=5 // pred_fallthru
        _
      %p152 = scmp.lt.s32.totalorder %s13, 2
      // Predicated region
      $region25: #{attention_forward.1} parent=5 // pred_check
        %p153 = pneg %p152
      $region26: #{attention_forward.1} parent=5 // pred_check_branch
        %155 = sbr.rel (%p153) target = $region28
      $region27: #{attention_forward.1} parent=5 // pred_region
        // Predicated region
        $region29: #{attention_forward.1} parent=27 // pred_check
          %p156 = pneg %p33
        $region30: #{attention_forward.1} parent=27 // pred_check_branch
          %158 = sbr.rel (%p156) target = $region32
        $region31: #{attention_forward.1} parent=27 // pred_region
          %p159 = scmp.lt.s32.totalorder %s13, 1
          %s160 = scalar_select %p159, %s13, 1
          %s161 = smul.addr %s160, 2
          %s162 = smul.addr %s161, 4
          %s163 = scalar_lea.vmem %s0, %s162
        $region32: #{attention_forward.1} parent=27 // pred_fallthru
          _
      $region28: #{attention_forward.1} parent=5 // pred_fallthru
        _
      %p164 = scmp.le.s32.totalorder 1, %s13
      %p165 = scmp.lt.s32.totalorder %s13, 3
      %p166 = pnand %p164, %p165
      %p167 = pneg %p166
      // Predicated region
      $region33: #{attention_forward.1} parent=5 // pred_check
        _
      $region34: #{attention_forward.1} parent=5 // pred_check_branch
        %169 = sbr.rel (%p166) target = $region36
      $region35: #{attention_forward.1} parent=5 // pred_region
        %s170 = ssub.s32 %s13, 1
        %p171 = scmp.lt.s32.totalorder %s18, 1
        %s172 = scalar_select %p171, %s18, 1
        %s173 = smul.addr %s172, 2
        %s174 = smul.addr %s173, 4
        %s175 = scalar_lea.vmem %s0, %s174
        %p176 = pneg %p39
        %p177 = pneg %p36
        %p178 = pneg %p60
        %p179 = pneg %p57
        %p180 = pneg %p81
        %p181 = pneg %p78
        %p182 = pneg %p102
        %p183 = pneg %p99
        %p184 = pneg %p128
        %p185 = pneg %p125
        %s186 = sand.u32 %s115, 1
        %s187 = scalar_lea.sflag [#allocation3], %s186
        %s188 = sand.u32 %s115, 1
        %s189 = smul.addr %s188, 16
        %s190 = scalar_lea.vmem [#allocation2], %s189
        %p191 = scmp.lt.s32.totalorder %s18, 1
        %s192 = scalar_select %p191, %s18, 1
        %s193 = smul.addr %s192, 2
        %s194 = smul.addr %s193, 4
        %s195 = scalar_lea.vmem %s0, %s194
        %v197 = vld [vmem:[%s195] sm:$0xf]
        %v198 = vld [vmem:[%s195 + $0x4] sm:$0xf]
        %v199 = vld [vmem:[%s1] sm:$0xff]
        %v200 = vld [vmem:[%s1 + $0x8] sm:$0xf]
        %v201 = vld [vmem:[%s1 + $0xc] sm:$0xff]
        %v202 = vld [vmem:[%s1 + $0x14] sm:$0xf]
        %v203 = vld [vmem:[%s1 + $0x18] sm:$0xff]
        %v204 = vld [vmem:[%s1 + $0x20] sm:$0xf]
        %v205 = vld [vmem:[%s1 + $0x24] sm:$0xff]
        %v206 = vld [vmem:[%s1 + $0x2c] sm:$0xf]
        %v207 = vld [vmem:[%s1 + $0x30] sm:$0xff]
        %v208 = vld [vmem:[%s1 + $0x38] sm:$0xf]
        %v209 = vld [vmem:[%s1 + $0x3c] sm:$0xff]
        %v210 = vld [vmem:[%s1 + $0x44] sm:$0xf]
        %v211 = vld [vmem:[%s1 + $0x48] sm:$0xff]
        %v212 = vld [vmem:[%s1 + $0x50] sm:$0xf]
        %v213 = vld [vmem:[%s1 + $0x54] sm:$0xff]
        %v214 = vld [vmem:[%s1 + $0x5c] sm:$0xf]
        %v215 = vld [vmem:[%s1 + $0x60] sm:$0xff]
        %v216 = vld [vmem:[%s1 + $0x68] sm:$0xf]
        %v217 = vld [vmem:[%s1 + $0x6c] sm:$0xff]
        %v218 = vld [vmem:[%s1 + $0x74] sm:$0xf]
        %v219 = vld [vmem:[%s1 + $0x78] sm:$0xff]
        %v220 = vld [vmem:[%s1 + $0x80] sm:$0xf]
        %v221 = vld [vmem:[%s1 + $0x84] sm:$0xff]
        %v222 = vld [vmem:[%s1 + $0x8c] sm:$0xf]
        %v223 = vld [vmem:[%s1 + $0x90] sm:$0xff]
        %v224 = vld [vmem:[%s1 + $0x98] sm:$0xf]
        %v225 = vld [vmem:[%s1 + $0x9c] sm:$0xff]
        %v226 = vld [vmem:[%s1 + $0xa4] sm:$0xf]
        %v227 = vld [vmem:[%s1 + $0xa8] sm:$0xff]
        %v228 = vld [vmem:[%s1 + $0xb0] sm:$0xf]
        %v229 = vld [vmem:[%s1 + $0xb4] sm:$0xff]
        %v230 = vld [vmem:[%s1 + $0xbc] sm:$0xf]
        %v233 = vunpack.c.l.b16 %v197
        %v234 = vunpack.c.l.b16 %v198
        %v235 = vpack.c.b16 %v234, %v233
        %v269 = vunpack.c.l.b16 %v199
        %v270 = vunpack.c.h.b16 %v199
        %v271 = vunpack.c.l.b16 %v200
        %v272 = vunpack.c.l.b16 %v201
        %v273 = vunpack.c.h.b16 %v201
        %v274 = vunpack.c.l.b16 %v202
        %v275 = vunpack.c.l.b16 %v203
        %v276 = vunpack.c.h.b16 %v203
        %v277 = vunpack.c.l.b16 %v204
        %v278 = vunpack.c.l.b16 %v205
        %v279 = vunpack.c.h.b16 %v205
        %v280 = vunpack.c.l.b16 %v206
        %v281 = vunpack.c.l.b16 %v207
        %v282 = vunpack.c.h.b16 %v207
        %v283 = vunpack.c.l.b16 %v208
        %v284 = vunpack.c.l.b16 %v209
        %v285 = vunpack.c.h.b16 %v209
        %v286 = vunpack.c.l.b16 %v210
        %v287 = vunpack.c.l.b16 %v211
        %v288 = vunpack.c.h.b16 %v211
        %v289 = vunpack.c.l.b16 %v212
        %v290 = vunpack.c.l.b16 %v213
        %v291 = vunpack.c.h.b16 %v213
        %v292 = vunpack.c.l.b16 %v214
        %v293 = vunpack.c.l.b16 %v215
        %v294 = vunpack.c.h.b16 %v215
        %v295 = vunpack.c.l.b16 %v216
        %v296 = vunpack.c.l.b16 %v217
        %v297 = vunpack.c.h.b16 %v217
        %v298 = vunpack.c.l.b16 %v218
        %v299 = vunpack.c.l.b16 %v219
        %v300 = vunpack.c.h.b16 %v219
        %v301 = vunpack.c.l.b16 %v220
        %v302 = vunpack.c.l.b16 %v221
        %v303 = vunpack.c.h.b16 %v221
        %v304 = vunpack.c.l.b16 %v222
        %v305 = vunpack.c.l.b16 %v223
        %v306 = vunpack.c.h.b16 %v223
        %v307 = vunpack.c.l.b16 %v224
        %v308 = vunpack.c.l.b16 %v225
        %v309 = vunpack.c.h.b16 %v225
        %v310 = vunpack.c.l.b16 %v226
        %v311 = vunpack.c.l.b16 %v227
        %v312 = vunpack.c.h.b16 %v227
        %v313 = vunpack.c.l.b16 %v228
        %v314 = vunpack.c.l.b16 %v229
        %v315 = vunpack.c.h.b16 %v229
        %v316 = vunpack.c.l.b16 %v230
        %v317 = vpack.c.b16 %v272, %v269
        %v318 = vpack.c.b16 %v273, %v270
        %v319 = vpack.c.b16 %v274, %v271
        %v320 = vpack.c.b16 %v278, %v275
        %v321 = vpack.c.b16 %v279, %v276
        %v322 = vpack.c.b16 %v280, %v277
        %v323 = vpack.c.b16 %v284, %v281
        %v324 = vpack.c.b16 %v285, %v282
        %v325 = vpack.c.b16 %v286, %v283
        %v326 = vpack.c.b16 %v290, %v287
        %v327 = vpack.c.b16 %v291, %v288
        %v328 = vpack.c.b16 %v292, %v289
        %v329 = vpack.c.b16 %v296, %v293
        %v330 = vpack.c.b16 %v297, %v294
        %v331 = vpack.c.b16 %v298, %v295
        %v332 = vpack.c.b16 %v302, %v299
        %v333 = vpack.c.b16 %v303, %v300
        %v334 = vpack.c.b16 %v304, %v301
        %v335 = vpack.c.b16 %v308, %v305
        %v336 = vpack.c.b16 %v309, %v306
        %v337 = vpack.c.b16 %v310, %v307
        %v338 = vpack.c.b16 %v314, %v311
        %v339 = vpack.c.b16 %v315, %v312
        %v340 = vpack.c.b16 %v316, %v313
        %365 = vmatpush.bf16.msra.mxu0 %v338
        %366 = vmatpush.bf16.msra.mxu0 %v335
        %367 = vmatpush.bf16.msra.mxu0 %v332
        %368 = vmatpush.bf16.msra.mxu0 %v329
        %369 = vmatpush.bf16.msra.mxu0 %v326
        %370 = vmatpush.bf16.msra.mxu0 %v323
        %371 = vmatpush.bf16.msra.mxu0 %v320
        %372 = vmatpush.bf16.msra.mxu0 %v317
        %373 = vmatmul.bf16.gmra.mxu0 %v235
        %v374 = vpop.f32.mrf.mxu0
        %v375 = vadd.f32 0.0, %v374
        %v376 = vpop.f32.mrf.mxu0
        %v377 = vadd.f32 0.0, %v376
        %378 = vdwg.mxu0
        %379 = vmatpush.bf16.msra.mxu0 %v339
        %380 = vmatpush.bf16.msra.mxu0 %v336
        %381 = vmatpush.bf16.msra.mxu0 %v333
        %382 = vmatpush.bf16.msra.mxu0 %v330
        %383 = vmatpush.bf16.msra.mxu0 %v327
        %384 = vmatpush.bf16.msra.mxu0 %v324
        %385 = vmatpush.bf16.msra.mxu0 %v321
        %386 = vmatpush.bf16.msra.mxu0 %v318
        %387 = vmatmul.bf16.gmra.mxu0 %v235
        %v388 = vpop.f32.mrf.mxu0
        %v389 = vadd.f32 0.0, %v388
        %v390 = vpop.f32.mrf.mxu0
        %v391 = vadd.f32 0.0, %v390
        %392 = vdwg.mxu0
        %393 = vmatpush.bf16.msra.mxu0 %v340
        %394 = vmatpush.bf16.msra.mxu0 %v337
        %395 = vmatpush.bf16.msra.mxu0 %v334
        %396 = vmatpush.bf16.msra.mxu0 %v331
        %397 = vmatpush.bf16.msra.mxu0 %v328
        %398 = vmatpush.bf16.msra.mxu0 %v325
        %399 = vmatpush.bf16.msra.mxu0 %v322
        %400 = vmatpush.bf16.msra.mxu0 %v319
        %401 = vmatmul.bf16.gmra.mxu0 %v235
        %v402 = vpop.f32.mrf.mxu0
        %v403 = vadd.f32 0.0, %v402
        %v404 = vpop.f32.mrf.mxu0
        %v405 = vadd.f32 0.0, %v404
        %406 = vdwg.mxu0
        %v407 = vpack.c.bf16 %v377, %v375
        %v408 = vpack.c.bf16 %v391, %v389
        %v409 = vpack.c.bf16 %v405, %v403
        %vm410 = vcmask 130048
        %v412 = vsel %vm410, %v407, 0
        %v415 = vsel %vm410, %v408, 0
        %417 = vmatpush.bf16.xpose.msra.mxu0 0
        %418 = vmatpush.bf16.xpose.msra.mxu0 0
        %419 = vmatpush.bf16.xpose.msra.mxu0 0
        %420 = vmatpush.bf16.xpose.msra.mxu0 0
        %421 = vmatpush.bf16.xpose.msra.mxu0 0
        %422 = vmatpush.bf16.xpose.msra.mxu0 0
        %423 = vmatpush.bf16.xpose.msra.mxu0 0
        %424 = vmatpush.bf16.xpose.msra.mxu0 %v415
        %425 = vmatmul.bf16.gmra.mxu0 %v412
        %v426 = vpop.f32.mrf.mxu0
        %v427 = vadd.f32 0.0, %v426
        %v428 = vpop.f32.mrf.mxu0
        %v429 = vadd.f32 0.0, %v428
        %430 = vdwg.mxu0
        %v431 = vmul.f32 %v427, 0.25
        %v432 = vmul.f32 %v429, 0.25
        %v433 = vsel %vm410, %v431, -inf
        %434 = vmax.xlane.f32.xlu0 %v433
        %v435 = vpop.xlane.xlu0 %434
        %v436 = vsel %vm410, %v432, -inf
        %437 = vmax.xlane.f32.xlu0 %v436
        %v438 = vpop.xlane.xlu0 %437
        %v439 = vsub.f32 %v431, %v435
        %v440 = vsub.f32 %v432, %v438
        %v441 = vmul.f32 %v439, 1.442695
        %v442 = vpow.pop %v441
        %v443 = vmul.f32 %v440, 1.442695
        %v444 = vpow.pop %v443
        %v445 = vsel %vm410, %v442, 0.0
        %446 = vadd.xlane.f32.xlu0 %v445
        %v447 = vpop.xlane.xlu0 %446
        %v448 = vsel %vm410, %v444, 0.0
        %449 = vadd.xlane.f32.xlu0 %v448
        %v450 = vpop.xlane.xlu0 %449
        %v451 = vrcp.pop %v447
        %v452 = vrcp.pop %v450
        %v453 = vmul.f32 %v442, %v451
        %v454 = vmul.f32 %v444, %v452
        %v455 = vpack.c.bf16 %v454, %v453
        %v457 = vsel %vm410, %v455, 0
        %459 = vmatpush.bf16.msra.mxu0 0
        %460 = vmatpush.bf16.msra.mxu0 0
        %461 = vmatpush.bf16.msra.mxu0 0
        %462 = vmatpush.bf16.msra.mxu0 0
        %463 = vmatpush.bf16.msra.mxu0 0
        %464 = vmatpush.bf16.msra.mxu0 0
        %465 = vmatpush.bf16.msra.mxu0 0
        %466 = vmatpush.bf16.msra.mxu0 %v409
        %467 = vmatmul.bf16.gmra.mxu0 %v457
        %v468 = vpop.f32.mrf.mxu0
        %v469 = vadd.f32 0.0, %v468
        %v470 = vpop.f32.mrf.mxu0
        %v471 = vadd.f32 0.0, %v470
        %472 = vdwg.mxu0
        %474 = vrot.lane.b32.xlu0 %v407, 112
        %v475 = vpop.permute.xlu0 %474
        %477 = vrot.lane.b32.xlu0 %v408, 112
        %v478 = vpop.permute.xlu0 %477
        %v480 = vsel %vm410, %v475, 0
        %v483 = vsel %vm410, %v478, 0
        %485 = vmatpush.bf16.xpose.msra.mxu0 0
        %486 = vmatpush.bf16.xpose.msra.mxu0 0
        %487 = vmatpush.bf16.xpose.msra.mxu0 0
        %488 = vmatpush.bf16.xpose.msra.mxu0 0
        %489 = vmatpush.bf16.xpose.msra.mxu0 0
        %490 = vmatpush.bf16.xpose.msra.mxu0 0
        %491 = vmatpush.bf16.xpose.msra.mxu0 0
        %492 = vmatpush.bf16.xpose.msra.mxu0 %v483
        %493 = vmatmul.bf16.gmra.mxu0 %v480
        %v494 = vpop.f32.mrf.mxu0
        %v495 = vadd.f32 0.0, %v494
        %v496 = vpop.f32.mrf.mxu0
        %v497 = vadd.f32 0.0, %v496
        %498 = vdwg.mxu0
        %v499 = vmul.f32 %v495, 0.25
        %v500 = vmul.f32 %v497, 0.25
        %v501 = vsel %vm410, %v499, -inf
        %502 = vmax.xlane.f32.xlu0 %v501
        %v503 = vpop.xlane.xlu0 %502
        %v504 = vsel %vm410, %v500, -inf
        %505 = vmax.xlane.f32.xlu0 %v504
        %v506 = vpop.xlane.xlu0 %505
        %v507 = vsub.f32 %v499, %v503
        %v508 = vsub.f32 %v500, %v506
        %v509 = vmul.f32 %v507, 1.442695
        %v510 = vpow.pop %v509
        %v511 = vmul.f32 %v508, 1.442695
        %v512 = vpow.pop %v511
        %v513 = vsel %vm410, %v510, 0.0
        %514 = vadd.xlane.f32.xlu0 %v513
        %v515 = vpop.xlane.xlu0 %514
        %v516 = vsel %vm410, %v512, 0.0
        %517 = vadd.xlane.f32.xlu0 %v516
        %v518 = vpop.xlane.xlu0 %517
        %v519 = vrcp.pop %v515
        %v520 = vrcp.pop %v518
        %v521 = vmul.f32 %v510, %v519
        %v522 = vmul.f32 %v512, %v520
        %v523 = vpack.c.bf16 %v522, %v521
        %525 = vrot.lane.b32.xlu0 %v409, 112
        %v526 = vpop.permute.xlu0 %525
        %v529 = vsel %vm410, %v523, 0
        %531 = vmatpush.bf16.msra.mxu0 0
        %532 = vmatpush.bf16.msra.mxu0 0
        %533 = vmatpush.bf16.msra.mxu0 0
        %534 = vmatpush.bf16.msra.mxu0 0
        %535 = vmatpush.bf16.msra.mxu0 0
        %536 = vmatpush.bf16.msra.mxu0 0
        %537 = vmatpush.bf16.msra.mxu0 0
        %538 = vmatpush.bf16.msra.mxu0 %v526
        %539 = vmatmul.bf16.gmra.mxu0 %v529
        %v540 = vpop.f32.mrf.mxu0
        %v541 = vadd.f32 0.0, %v540
        %v542 = vpop.f32.mrf.mxu0
        %v543 = vadd.f32 0.0, %v542
        %544 = vdwg.mxu0
        %545 = vrot.lane.b32.xlu0 %v407, 96
        %v546 = vpop.permute.xlu0 %545
        %547 = vrot.lane.b32.xlu0 %v408, 96
        %v548 = vpop.permute.xlu0 %547
        %v550 = vsel %vm410, %v546, 0
        %v553 = vsel %vm410, %v548, 0
        %555 = vmatpush.bf16.xpose.msra.mxu0 0
        %556 = vmatpush.bf16.xpose.msra.mxu0 0
        %557 = vmatpush.bf16.xpose.msra.mxu0 0
        %558 = vmatpush.bf16.xpose.msra.mxu0 0
        %559 = vmatpush.bf16.xpose.msra.mxu0 0
        %560 = vmatpush.bf16.xpose.msra.mxu0 0
        %561 = vmatpush.bf16.xpose.msra.mxu0 0
        %562 = vmatpush.bf16.xpose.msra.mxu0 %v553
        %563 = vmatmul.bf16.gmra.mxu0 %v550
        %v564 = vpop.f32.mrf.mxu0
        %v565 = vadd.f32 0.0, %v564
        %v566 = vpop.f32.mrf.mxu0
        %v567 = vadd.f32 0.0, %v566
        %568 = vdwg.mxu0
        %v569 = vmul.f32 %v565, 0.25
        %v570 = vmul.f32 %v567, 0.25
        %v571 = vsel %vm410, %v569, -inf
        %572 = vmax.xlane.f32.xlu0 %v571
        %v573 = vpop.xlane.xlu0 %572
        %v574 = vsel %vm410, %v570, -inf
        %575 = vmax.xlane.f32.xlu0 %v574
        %v576 = vpop.xlane.xlu0 %575
        %v577 = vsub.f32 %v569, %v573
        %v578 = vsub.f32 %v570, %v576
        %v579 = vmul.f32 %v577, 1.442695
        %v580 = vpow.pop %v579
        %v581 = vmul.f32 %v578, 1.442695
        %v582 = vpow.pop %v581
        %v583 = vsel %vm410, %v580, 0.0
        %584 = vadd.xlane.f32.xlu0 %v583
        %v585 = vpop.xlane.xlu0 %584
        %v586 = vsel %vm410, %v582, 0.0
        %587 = vadd.xlane.f32.xlu0 %v586
        %v588 = vpop.xlane.xlu0 %587
        %v589 = vrcp.pop %v585
        %v590 = vrcp.pop %v588
        %v591 = vmul.f32 %v580, %v589
        %v592 = vmul.f32 %v582, %v590
        %v593 = vpack.c.bf16 %v592, %v591
        %594 = vrot.lane.b32.xlu0 %v409, 96
        %v595 = vpop.permute.xlu0 %594
        %v598 = vsel %vm410, %v593, 0
        %600 = vmatpush.bf16.msra.mxu0 0
        %601 = vmatpush.bf16.msra.mxu0 0
        %602 = vmatpush.bf16.msra.mxu0 0
        %603 = vmatpush.bf16.msra.mxu0 0
        %604 = vmatpush.bf16.msra.mxu0 0
        %605 = vmatpush.bf16.msra.mxu0 0
        %606 = vmatpush.bf16.msra.mxu0 0
        %607 = vmatpush.bf16.msra.mxu0 %v595
        %608 = vmatmul.bf16.gmra.mxu0 %v598
        %v609 = vpop.f32.mrf.mxu0
        %v610 = vadd.f32 0.0, %v609
        %v611 = vpop.f32.mrf.mxu0
        %v612 = vadd.f32 0.0, %v611
        %613 = vdwg.mxu0
        %614 = vrot.lane.b32.xlu0 %v407, 80
        %v615 = vpop.permute.xlu0 %614
        %616 = vrot.lane.b32.xlu0 %v408, 80
        %v617 = vpop.permute.xlu0 %616
        %v619 = vsel %vm410, %v615, 0
        %v622 = vsel %vm410, %v617, 0
        %624 = vmatpush.bf16.xpose.msra.mxu0 0
        %625 = vmatpush.bf16.xpose.msra.mxu0 0
        %626 = vmatpush.bf16.xpose.msra.mxu0 0
        %627 = vmatpush.bf16.xpose.msra.mxu0 0
        %628 = vmatpush.bf16.xpose.msra.mxu0 0
        %629 = vmatpush.bf16.xpose.msra.mxu0 0
        %630 = vmatpush.bf16.xpose.msra.mxu0 0
        %631 = vmatpush.bf16.xpose.msra.mxu0 %v622
        %632 = vmatmul.bf16.gmra.mxu0 %v619
        %v633 = vpop.f32.mrf.mxu0
        %v634 = vadd.f32 0.0, %v633
        %v635 = vpop.f32.mrf.mxu0
        %v636 = vadd.f32 0.0, %v635
        %637 = vdwg.mxu0
        %v638 = vmul.f32 %v634, 0.25
        %v639 = vmul.f32 %v636, 0.25
        %v640 = vsel %vm410, %v638, -inf
        %641 = vmax.xlane.f32.xlu0 %v640
        %v642 = vpop.xlane.xlu0 %641
        %v643 = vsel %vm410, %v639, -inf
        %644 = vmax.xlane.f32.xlu0 %v643
        %v645 = vpop.xlane.xlu0 %644
        %v646 = vsub.f32 %v638, %v642
        %v647 = vsub.f32 %v639, %v645
        %v648 = vmul.f32 %v646, 1.442695
        %v649 = vpow.pop %v648
        %v650 = vmul.f32 %v647, 1.442695
        %v651 = vpow.pop %v650
        %v652 = vsel %vm410, %v649, 0.0
        %653 = vadd.xlane.f32.xlu0 %v652
        %v654 = vpop.xlane.xlu0 %653
        %v655 = vsel %vm410, %v651, 0.0
        %656 = vadd.xlane.f32.xlu0 %v655
        %v657 = vpop.xlane.xlu0 %656
        %v658 = vrcp.pop %v654
        %v659 = vrcp.pop %v657
        %v660 = vmul.f32 %v649, %v658
        %v661 = vmul.f32 %v651, %v659
        %v662 = vpack.c.bf16 %v661, %v660
        %663 = vrot.lane.b32.xlu0 %v409, 80
        %v664 = vpop.permute.xlu0 %663
        %v667 = vsel %vm410, %v662, 0
        %669 = vmatpush.bf16.msra.mxu0 0
        %670 = vmatpush.bf16.msra.mxu0 0
        %671 = vmatpush.bf16.msra.mxu0 0
        %672 = vmatpush.bf16.msra.mxu0 0
        %673 = vmatpush.bf16.msra.mxu0 0
        %674 = vmatpush.bf16.msra.mxu0 0
        %675 = vmatpush.bf16.msra.mxu0 0
        %676 = vmatpush.bf16.msra.mxu0 %v664
        %677 = vmatmul.bf16.gmra.mxu0 %v667
        %v678 = vpop.f32.mrf.mxu0
        %v679 = vadd.f32 0.0, %v678
        %v680 = vpop.f32.mrf.mxu0
        %v681 = vadd.f32 0.0, %v680
        %682 = vdwg.mxu0
        %683 = vrot.lane.b32.xlu0 %v407, 64
        %v684 = vpop.permute.xlu0 %683
        %685 = vrot.lane.b32.xlu0 %v408, 64
        %v686 = vpop.permute.xlu0 %685
        %v688 = vsel %vm410, %v684, 0
        %v691 = vsel %vm410, %v686, 0
        %693 = vmatpush.bf16.xpose.msra.mxu0 0
        %694 = vmatpush.bf16.xpose.msra.mxu0 0
        %695 = vmatpush.bf16.xpose.msra.mxu0 0
        %696 = vmatpush.bf16.xpose.msra.mxu0 0
        %697 = vmatpush.bf16.xpose.msra.mxu0 0
        %698 = vmatpush.bf16.xpose.msra.mxu0 0
        %699 = vmatpush.bf16.xpose.msra.mxu0 0
        %700 = vmatpush.bf16.xpose.msra.mxu0 %v691
        %701 = vmatmul.bf16.gmra.mxu0 %v688
        %v702 = vpop.f32.mrf.mxu0
        %v703 = vadd.f32 0.0, %v702
        %v704 = vpop.f32.mrf.mxu0
        %v705 = vadd.f32 0.0, %v704
        %706 = vdwg.mxu0
        %v707 = vmul.f32 %v703, 0.25
        %v708 = vmul.f32 %v705, 0.25
        %v709 = vsel %vm410, %v707, -inf
        %710 = vmax.xlane.f32.xlu0 %v709
        %v711 = vpop.xlane.xlu0 %710
        %v712 = vsel %vm410, %v708, -inf
        %713 = vmax.xlane.f32.xlu0 %v712
        %v714 = vpop.xlane.xlu0 %713
        %v715 = vsub.f32 %v707, %v711
        %v716 = vsub.f32 %v708, %v714
        %v717 = vmul.f32 %v715, 1.442695
        %v718 = vpow.pop %v717
        %v719 = vmul.f32 %v716, 1.442695
        %v720 = vpow.pop %v719
        %v721 = vsel %vm410, %v718, 0.0
        %722 = vadd.xlane.f32.xlu0 %v721
        %v723 = vpop.xlane.xlu0 %722
        %v724 = vsel %vm410, %v720, 0.0
        %725 = vadd.xlane.f32.xlu0 %v724
        %v726 = vpop.xlane.xlu0 %725
        %v727 = vrcp.pop %v723
        %v728 = vrcp.pop %v726
        %v729 = vmul.f32 %v718, %v727
        %v730 = vmul.f32 %v720, %v728
        %v731 = vpack.c.bf16 %v730, %v729
        %732 = vrot.lane.b32.xlu0 %v409, 64
        %v733 = vpop.permute.xlu0 %732
        %v736 = vsel %vm410, %v731, 0
        %738 = vmatpush.bf16.msra.mxu0 0
        %739 = vmatpush.bf16.msra.mxu0 0
        %740 = vmatpush.bf16.msra.mxu0 0
        %741 = vmatpush.bf16.msra.mxu0 0
        %742 = vmatpush.bf16.msra.mxu0 0
        %743 = vmatpush.bf16.msra.mxu0 0
        %744 = vmatpush.bf16.msra.mxu0 0
        %745 = vmatpush.bf16.msra.mxu0 %v733
        %746 = vmatmul.bf16.gmra.mxu0 %v736
        %v747 = vpop.f32.mrf.mxu0
        %v748 = vadd.f32 0.0, %v747
        %v749 = vpop.f32.mrf.mxu0
        %v750 = vadd.f32 0.0, %v749
        %751 = vdwg.mxu0
        %752 = vrot.lane.b32.xlu0 %v407, 48
        %v753 = vpop.permute.xlu0 %752
        %754 = vrot.lane.b32.xlu0 %v408, 48
        %v755 = vpop.permute.xlu0 %754
        %v757 = vsel %vm410, %v753, 0
        %v760 = vsel %vm410, %v755, 0
        %762 = vmatpush.bf16.xpose.msra.mxu0 0
        %763 = vmatpush.bf16.xpose.msra.mxu0 0
        %764 = vmatpush.bf16.xpose.msra.mxu0 0
        %765 = vmatpush.bf16.xpose.msra.mxu0 0
        %766 = vmatpush.bf16.xpose.msra.mxu0 0
        %767 = vmatpush.bf16.xpose.msra.mxu0 0
        %768 = vmatpush.bf16.xpose.msra.mxu0 0
        %769 = vmatpush.bf16.xpose.msra.mxu0 %v760
        %770 = vmatmul.bf16.gmra.mxu0 %v757
        %v771 = vpop.f32.mrf.mxu0
        %v772 = vadd.f32 0.0, %v771
        %v773 = vpop.f32.mrf.mxu0
        %v774 = vadd.f32 0.0, %v773
        %775 = vdwg.mxu0
        %v776 = vmul.f32 %v772, 0.25
        %v777 = vmul.f32 %v774, 0.25
        %v778 = vsel %vm410, %v776, -inf
        %779 = vmax.xlane.f32.xlu0 %v778
        %v780 = vpop.xlane.xlu0 %779
        %v781 = vsel %vm410, %v777, -inf
        %782 = vmax.xlane.f32.xlu0 %v781
        %v783 = vpop.xlane.xlu0 %782
        %v784 = vsub.f32 %v776, %v780
        %v785 = vsub.f32 %v777, %v783
        %v786 = vmul.f32 %v784, 1.442695
        %v787 = vpow.pop %v786
        %v788 = vmul.f32 %v785, 1.442695
        %v789 = vpow.pop %v788
        %v790 = vsel %vm410, %v787, 0.0
        %791 = vadd.xlane.f32.xlu0 %v790
        %v792 = vpop.xlane.xlu0 %791
        %v793 = vsel %vm410, %v789, 0.0
        %794 = vadd.xlane.f32.xlu0 %v793
        %v795 = vpop.xlane.xlu0 %794
        %v796 = vrcp.pop %v792
        %v797 = vrcp.pop %v795
        %v798 = vmul.f32 %v787, %v796
        %v799 = vmul.f32 %v789, %v797
        %v800 = vpack.c.bf16 %v799, %v798
        %801 = vrot.lane.b32.xlu0 %v409, 48
        %v802 = vpop.permute.xlu0 %801
        %v805 = vsel %vm410, %v800, 0
        %807 = vmatpush.bf16.msra.mxu0 0
        %808 = vmatpush.bf16.msra.mxu0 0
        %809 = vmatpush.bf16.msra.mxu0 0
        %810 = vmatpush.bf16.msra.mxu0 0
        %811 = vmatpush.bf16.msra.mxu0 0
        %812 = vmatpush.bf16.msra.mxu0 0
        %813 = vmatpush.bf16.msra.mxu0 0
        %814 = vmatpush.bf16.msra.mxu0 %v802
        %815 = vmatmul.bf16.gmra.mxu0 %v805
        %v816 = vpop.f32.mrf.mxu0
        %v817 = vadd.f32 0.0, %v816
        %v818 = vpop.f32.mrf.mxu0
        %v819 = vadd.f32 0.0, %v818
        %820 = vdwg.mxu0
        %821 = vrot.lane.b32.xlu0 %v407, 32
        %v822 = vpop.permute.xlu0 %821
        %823 = vrot.lane.b32.xlu0 %v408, 32
        %v824 = vpop.permute.xlu0 %823
        %v826 = vsel %vm410, %v822, 0
        %v829 = vsel %vm410, %v824, 0
        %831 = vmatpush.bf16.xpose.msra.mxu0 0
        %832 = vmatpush.bf16.xpose.msra.mxu0 0
        %833 = vmatpush.bf16.xpose.msra.mxu0 0
        %834 = vmatpush.bf16.xpose.msra.mxu0 0
        %835 = vmatpush.bf16.xpose.msra.mxu0 0
        %836 = vmatpush.bf16.xpose.msra.mxu0 0
        %837 = vmatpush.bf16.xpose.msra.mxu0 0
        %838 = vmatpush.bf16.xpose.msra.mxu0 %v829
        %839 = vmatmul.bf16.gmra.mxu0 %v826
        %v840 = vpop.f32.mrf.mxu0
        %v841 = vadd.f32 0.0, %v840
        %v842 = vpop.f32.mrf.mxu0
        %v843 = vadd.f32 0.0, %v842
        %844 = vdwg.mxu0
        %v845 = vmul.f32 %v841, 0.25
        %v846 = vmul.f32 %v843, 0.25
        %v847 = vsel %vm410, %v845, -inf
        %848 = vmax.xlane.f32.xlu0 %v847
        %v849 = vpop.xlane.xlu0 %848
        %v850 = vsel %vm410, %v846, -inf
        %851 = vmax.xlane.f32.xlu0 %v850
        %v852 = vpop.xlane.xlu0 %851
        %v853 = vsub.f32 %v845, %v849
        %v854 = vsub.f32 %v846, %v852
        %v855 = vmul.f32 %v853, 1.442695
        %v856 = vpow.pop %v855
        %v857 = vmul.f32 %v854, 1.442695
        %v858 = vpow.pop %v857
        %v859 = vsel %vm410, %v856, 0.0
        %860 = vadd.xlane.f32.xlu0 %v859
        %v861 = vpop.xlane.xlu0 %860
        %v862 = vsel %vm410, %v858, 0.0
        %863 = vadd.xlane.f32.xlu0 %v862
        %v864 = vpop.xlane.xlu0 %863
        %v865 = vrcp.pop %v861
        %v866 = vrcp.pop %v864
        %v867 = vmul.f32 %v856, %v865
        %v868 = vmul.f32 %v858, %v866
        %v869 = vpack.c.bf16 %v868, %v867
        %870 = vrot.lane.b32.xlu0 %v409, 32
        %v871 = vpop.permute.xlu0 %870
        %v874 = vsel %vm410, %v869, 0
        %876 = vmatpush.bf16.msra.mxu0 0
        %877 = vmatpush.bf16.msra.mxu0 0
        %878 = vmatpush.bf16.msra.mxu0 0
        %879 = vmatpush.bf16.msra.mxu0 0
        %880 = vmatpush.bf16.msra.mxu0 0
        %881 = vmatpush.bf16.msra.mxu0 0
        %882 = vmatpush.bf16.msra.mxu0 0
        %883 = vmatpush.bf16.msra.mxu0 %v871
        %884 = vmatmul.bf16.gmra.mxu0 %v874
        %v885 = vpop.f32.mrf.mxu0
        %v886 = vadd.f32 0.0, %v885
        %v887 = vpop.f32.mrf.mxu0
        %v888 = vadd.f32 0.0, %v887
        %889 = vdwg.mxu0
        %890 = vrot.lane.b32.xlu0 %v407, 16
        %v891 = vpop.permute.xlu0 %890
        %892 = vrot.lane.b32.xlu0 %v408, 16
        %v893 = vpop.permute.xlu0 %892
        %v895 = vsel %vm410, %v891, 0
        %v898 = vsel %vm410, %v893, 0
        %900 = vmatpush.bf16.xpose.msra.mxu0 0
        %901 = vmatpush.bf16.xpose.msra.mxu0 0
        %902 = vmatpush.bf16.xpose.msra.mxu0 0
        %903 = vmatpush.bf16.xpose.msra.mxu0 0
        %904 = vmatpush.bf16.xpose.msra.mxu0 0
        %905 = vmatpush.bf16.xpose.msra.mxu0 0
        %906 = vmatpush.bf16.xpose.msra.mxu0 0
        %907 = vmatpush.bf16.xpose.msra.mxu0 %v898
        %908 = vmatmul.bf16.gmra.mxu0 %v895
        %v909 = vpop.f32.mrf.mxu0
        %v910 = vadd.f32 0.0, %v909
        %v911 = vpop.f32.mrf.mxu0
        %v912 = vadd.f32 0.0, %v911
        %913 = vdwg.mxu0
        %v914 = vmul.f32 %v910, 0.25
        %v915 = vmul.f32 %v912, 0.25
        %v916 = vsel %vm410, %v914, -inf
        %917 = vmax.xlane.f32.xlu0 %v916
        %v918 = vpop.xlane.xlu0 %917
        %v919 = vsel %vm410, %v915, -inf
        %920 = vmax.xlane.f32.xlu0 %v919
        %v921 = vpop.xlane.xlu0 %920
        %v922 = vsub.f32 %v914, %v918
        %v923 = vsub.f32 %v915, %v921
        %v924 = vmul.f32 %v922, 1.442695
        %v925 = vpow.pop %v924
        %v926 = vmul.f32 %v923, 1.442695
        %v927 = vpow.pop %v926
        %v928 = vsel %vm410, %v925, 0.0
        %929 = vadd.xlane.f32.xlu0 %v928
        %v930 = vpop.xlane.xlu0 %929
        %v931 = vsel %vm410, %v927, 0.0
        %932 = vadd.xlane.f32.xlu0 %v931
        %v933 = vpop.xlane.xlu0 %932
        %v934 = vrcp.pop %v930
        %v935 = vrcp.pop %v933
        %v936 = vmul.f32 %v925, %v934
        %v937 = vmul.f32 %v927, %v935
        %v938 = vpack.c.bf16 %v937, %v936
        %939 = vrot.lane.b32.xlu0 %v409, 16
        %v940 = vpop.permute.xlu0 %939
        %v943 = vsel %vm410, %v938, 0
        %945 = vmatpush.bf16.msra.mxu0 0
        %946 = vmatpush.bf16.msra.mxu0 0
        %947 = vmatpush.bf16.msra.mxu0 0
        %948 = vmatpush.bf16.msra.mxu0 0
        %949 = vmatpush.bf16.msra.mxu0 0
        %950 = vmatpush.bf16.msra.mxu0 0
        %951 = vmatpush.bf16.msra.mxu0 0
        %952 = vmatpush.bf16.msra.mxu0 %v940
        %953 = vmatmul.bf16.gmra.mxu0 %v943
        %v954 = vpop.f32.mrf.mxu0
        %v955 = vadd.f32 0.0, %v954
        %v956 = vpop.f32.mrf.mxu0
        %v957 = vadd.f32 0.0, %v956
        %958 = vdwg.mxu0
        %961 = vrot.lane.b32.xlu0 %v541, 16
        %v962 = vpop.permute.xlu0 %961
        %963 = vrot.lane.b32.xlu0 %v543, 16
        %v964 = vpop.permute.xlu0 %963
        %969 = vrot.lane.b32.xlu0 %v610, 32
        %v970 = vpop.permute.xlu0 %969
        %971 = vrot.lane.b32.xlu0 %v612, 32
        %v972 = vpop.permute.xlu0 %971
        %977 = vrot.lane.b32.xlu0 %v679, 48
        %v978 = vpop.permute.xlu0 %977
        %979 = vrot.lane.b32.xlu0 %v681, 48
        %v980 = vpop.permute.xlu0 %979
        %985 = vrot.lane.b32.xlu0 %v748, 64
        %v986 = vpop.permute.xlu0 %985
        %987 = vrot.lane.b32.xlu0 %v750, 64
        %v988 = vpop.permute.xlu0 %987
        %993 = vrot.lane.b32.xlu0 %v817, 80
        %v994 = vpop.permute.xlu0 %993
        %995 = vrot.lane.b32.xlu0 %v819, 80
        %v996 = vpop.permute.xlu0 %995
        %1001 = vrot.lane.b32.xlu0 %v886, 96
        %v1002 = vpop.permute.xlu0 %1001
        %1003 = vrot.lane.b32.xlu0 %v888, 96
        %v1004 = vpop.permute.xlu0 %1003
        %1009 = vrot.lane.b32.xlu0 %v955, 112
        %v1010 = vpop.permute.xlu0 %1009
        %1011 = vrot.lane.b32.xlu0 %v957, 112
        %v1012 = vpop.permute.xlu0 %1011
        %v1015 = vsel %vm410, %v469, %v962
        %v1016 = vsel %vm410, %v471, %v964
        %vm1017 = vcmask 261120
        %v1018 = vsel %vm1017, %v1015, %v970
        %v1019 = vsel %vm1017, %v1016, %v972
        %vm1020 = vcmask 392192
        %v1021 = vsel %vm1020, %v1018, %v978
        %v1022 = vsel %vm1020, %v1019, %v980
        %vm1023 = vcmask 523264
        %v1024 = vsel %vm1023, %v1021, %v986
        %v1025 = vsel %vm1023, %v1022, %v988
        %vm1026 = vcmask 654336
        %v1027 = vsel %vm1026, %v1024, %v994
        %v1028 = vsel %vm1026, %v1025, %v996
        %vm1029 = vcmask 785408
        %v1030 = vsel %vm1029, %v1027, %v1002
        %v1031 = vsel %vm1029, %v1028, %v1004
        %vm1032 = vcmask 916480
        %v1033 = vsel %vm1032, %v1030, %v1010
        %v1034 = vsel %vm1032, %v1031, %v1012
        %v1035 = vpack.c.bf16 %v1034, %v1033
        %v1036 = vld [vmem:[%s2] sm:$0xf]
        %v1037 = vld [vmem:[%s2 + $0x4] sm:$0xf]
        %v1038 = vld [vmem:[%s2 + $0x8] sm:$0xf]
        %v1039 = vld [vmem:[%s2 + $0xc] sm:$0xf]
        %v1040 = vld [vmem:[%s2 + $0x10] sm:$0xf]
        %v1041 = vld [vmem:[%s2 + $0x14] sm:$0xf]
        %v1042 = vld [vmem:[%s2 + $0x18] sm:$0xf]
        %v1043 = vld [vmem:[%s2 + $0x1c] sm:$0xf]
        %v1044 = vld [vmem:[%s2 + $0x20] sm:$0xf]
        %v1045 = vld [vmem:[%s2 + $0x24] sm:$0xf]
        %v1046 = vld [vmem:[%s2 + $0x28] sm:$0xf]
        %v1047 = vld [vmem:[%s2 + $0x2c] sm:$0xf]
        %v1048 = vld [vmem:[%s2 + $0x30] sm:$0xf]
        %v1049 = vld [vmem:[%s2 + $0x34] sm:$0xf]
        %v1050 = vld [vmem:[%s2 + $0x38] sm:$0xf]
        %v1051 = vld [vmem:[%s2 + $0x3c] sm:$0xf]
        %v1052 = vld [vmem:[%s3] sm:$0x1]
        %v1054 = vperm.slane %v1052, 0
        %v1072 = vunpack.c.l.b16 %v1036
        %v1073 = vunpack.c.l.b16 %v1037
        %v1074 = vunpack.c.l.b16 %v1038
        %v1075 = vunpack.c.l.b16 %v1039
        %v1076 = vunpack.c.l.b16 %v1040
        %v1077 = vunpack.c.l.b16 %v1041
        %v1078 = vunpack.c.l.b16 %v1042
        %v1079 = vunpack.c.l.b16 %v1043
        %v1080 = vunpack.c.l.b16 %v1044
        %v1081 = vunpack.c.l.b16 %v1045
        %v1082 = vunpack.c.l.b16 %v1046
        %v1083 = vunpack.c.l.b16 %v1047
        %v1084 = vunpack.c.l.b16 %v1048
        %v1085 = vunpack.c.l.b16 %v1049
        %v1086 = vunpack.c.l.b16 %v1050
        %v1087 = vunpack.c.l.b16 %v1051
        %v1088 = vpack.c.b16 %v1073, %v1072
        %v1089 = vpack.c.b16 %v1075, %v1074
        %v1090 = vpack.c.b16 %v1077, %v1076
        %v1091 = vpack.c.b16 %v1079, %v1078
        %v1092 = vpack.c.b16 %v1081, %v1080
        %v1093 = vpack.c.b16 %v1083, %v1082
        %v1094 = vpack.c.b16 %v1085, %v1084
        %v1095 = vpack.c.b16 %v1087, %v1086
        %1104 = vmatpush.bf16.msra.mxu0 %v1095
        %1105 = vmatpush.bf16.msra.mxu0 %v1094
        %1106 = vmatpush.bf16.msra.mxu0 %v1093
        %1107 = vmatpush.bf16.msra.mxu0 %v1092
        %1108 = vmatpush.bf16.msra.mxu0 %v1091
        %1109 = vmatpush.bf16.msra.mxu0 %v1090
        %1110 = vmatpush.bf16.msra.mxu0 %v1089
        %1111 = vmatpush.bf16.msra.mxu0 %v1088
        %1112 = vmatmul.bf16.gmra.mxu0 %v1035
        %v1113 = vpop.f32.mrf.mxu0
        %v1114 = vadd.f32 %v1054, %v1113
        %v1115 = vpop.f32.mrf.mxu0
        %v1116 = vadd.f32 %v1054, %v1115
        %1117 = vdwg.mxu0
        %1118 = vst [vmem:[%s190] sm:$0xff] %v1114
        %1119 = vst [vmem:[%s190 + $0x8] sm:$0xff] %v1116
        %s1120 = sand.u32 %s115, 1
        %s1121 = scalar_lea.sflag [#allocation3], %s1120
        %s1122 = sand.u32 %s115, 1
        %s1123 = smul.addr %s1122, 16
        %s1124 = scalar_lea.vmem [#allocation2], %s1123
        // Predicated region
        $region37: #{attention_forward.1} parent=35 // pred_check
          %p1125 = pneg %p125
        $region38: #{attention_forward.1} parent=35 // pred_check_branch
          %1127 = sbr.rel (%p1125) target = $region40
        $region39: #{attention_forward.1} parent=35 // pred_region
          %1129 = vsyncadd %s1121, 0
          %s1130 = smul.addr %s18, 2
          %s1131 = smul.addr %s1130, 8
          %s1132 = scalar_lea.hbm %s4, %s1131
          %s1133 = sshll.u32 %s1124, 4
          %s1134 = int_to_ptr.vmem [resolvable:$true] %s1133
          %s1135 = sshll.u32 %s1132, 4
          %s1136 = int_to_ptr.hbm [resolvable:$true] %s1135
          %1141 = dma.vmem_to_hbm [thread:$0]  %s1134, 256, %s1136, %s1121, 128, 128, 8
        $region40: #{attention_forward.1} parent=35 // pred_fallthru
          _
      $region36: #{attention_forward.1} parent=5 // pred_fallthru
        _
      %p1142 = scmp.le.s32.totalorder 2, %s13
      // Predicated region
      $region41: #{attention_forward.1} parent=5 // pred_check
        %p1143 = pneg %p1142
      $region42: #{attention_forward.1} parent=5 // pred_check_branch
        %1145 = sbr.rel (%p1143) target = $region44
      $region43: #{attention_forward.1} parent=5 // pred_region
        %s1146 = ssub.s32 %s13, 2
        // Predicated region
        $region45: #{attention_forward.1} parent=43 // pred_check
          %p1147 = pneg %p131
        $region46: #{attention_forward.1} parent=43 // pred_check_branch
          %1149 = sbr.rel (%p1147) target = $region48
        $region47: #{attention_forward.1} parent=43 // pred_region
          %s1150 = sand.u32 %s116, 1
          %s1151 = scalar_lea.sflag [#allocation3], %s1150
          %s1152 = sand.u32 %s116, 1
          %s1153 = smul.addr %s1152, 16
          %s1154 = scalar_lea.vmem [#allocation2], %s1153
          %1156 = dma.done %s1151, 256
        $region48: #{attention_forward.1} parent=43 // pred_fallthru
          _
      $region44: #{attention_forward.1} parent=5 // pred_fallthru
        _
    $region6: #{attention_forward.1} parent=1 // loop_footer
      %s17 = sadd.s32 1, %s13
    $region7: #{attention_forward.1} parent=1 // loop_footer_branch
      %12 = sbr.rel target = $region3
    $region8: #{attention_forward.1} parent=1 // loop_exit
      _
    %1157 = vsyncpa [#allocation3], 1
    %s1158 = scalar_lea.sflag [#allocation3], 1
    %1159 = vsyncpa %s1158, 1

</llo_original>
